<compile_context>
chip_gen: v7x
topology: tpu7x:2x2x1
jax: 0.10.0
libtpu: 0.0.40
codegen_flags: <defaults>
</compile_context>

<pallas_src>
import jax
import jax.numpy as jnp
from jax.experimental import pallas as pl
from jax.experimental.pallas import tpu as pltpu

_LANE = 128
_SUBLANE = 8


def _round_up(x, m):
    return (x + m - 1) // m * m


def _cdiv(a, b):
    return -(-a // b)


# ----------------------------------------------------------------------------
# Per-generation VMEM budget
# ----------------------------------------------------------------------------
def _vmem_budget():
    """Returns (tile_budget_bytes, scoped_vmem_limit_bytes)."""
    cap = None
    try:
        info = pltpu.get_tpu_info()
        for name in ("vmem_capacity_bytes", "vmem_bytes", "vmem_size_bytes"):
            cap = getattr(info, name, None)
            if cap:
                break
    except Exception:
        cap = None
    if not cap:
        cap = 64 * 1024 * 1024            # conservative default (v7x per-TC)
    # v5e/v6e (128 MiB) -> 96 MiB scoped limit; v7x (64 MiB) -> 48 MiB.
    limit = min(int(cap) * 3 // 4, int(cap) - 8 * 1024 * 1024)
    budget = int(limit * 0.85)            # headroom for Mosaic-internal scratch
    return budget, limit


# ----------------------------------------------------------------------------
# Tile selection
# ----------------------------------------------------------------------------
def _pick_tiles(rows, nf, t_pad, in_itm, w_itm, out_itm, budget,
                row_cap=512, min_row_tiles=1):
    """Pick (row_tile, col_tile) so the double-buffered working set fits VMEM.

    Prefers col_tile == t_pad: the weight block index is then constant across
    the grid, so W is DMA'd exactly once and stays resident.
    """
    def w_bytes(tn):          # weight + bias blocks (pipeline double-buffers)
        return 2 * nf * tn * w_itm + 2 * tn * 4

    def per_row(tn):          # x tile + out tile, double-buffered, per row
        return 2 * nf * in_itm + 2 * tn * out_itm

    # Column tile: largest multiple of 128 that divides t_pad and fits.
    q = t_pad // _LANE
    tn = _LANE
    for d in range(q, 0, -1):
        cand = _LANE * d
        if q % d == 0 and w_bytes(cand) + _SUBLANE * per_row(cand) <= budget:
            tn = cand
            break

    # Row tile: largest multiple of 8 (capped) whose footprint fits the budget.
    tm = _round_up(min(row_cap, _round_up(rows, _SUBLANE)), _SUBLANE)
    while tm > _SUBLANE and w_bytes(tn) + tm * per_row(tn) > budget:
        tm = _round_up(max(_SUBLANE, tm // 2), _SUBLANE)

    if min_row_tiles > 1 and rows > min_row_tiles * _SUBLANE:
        # Give each v7x TensorCore at least one row tile; near-free elsewhere.
        tm = min(tm, _round_up(_cdiv(rows, min_row_tiles), _SUBLANE))
    return tm, tn


# ----------------------------------------------------------------------------
# Kernel (shared by both paths)
# ----------------------------------------------------------------------------
def _head_matmul_kernel(x_ref, w_ref, b_ref, o_ref):
    # x_ref: (TM, nf)   w_ref: (nf, TN)   b_ref: (1, TN)   o_ref: (TM, TN)
    acc = jnp.dot(x_ref[...], w_ref[...], preferred_element_type=jnp.float32)
    o_ref[...] = (acc + b_ref[...].astype(jnp.float32)).astype(o_ref.dtype)


# ----------------------------------------------------------------------------
# individual = False : one shared Linear(nf, T) for all variables
# ----------------------------------------------------------------------------
def flatten_head_shared(x, w, b, *, compute_dtype=jnp.bfloat16):
    """x: [B, V, d_model, patch_num], w: [nf, T] (pre-transposed), b: [T].

    Returns [B, V, T].
    """
    B, V, D, P = x.shape
    nf = D * P
    T = w.shape[1]
    M = B * V
    out_dtype = x.dtype

    x2 = x.reshape(M, nf)                       # contiguous merge: free
    if compute_dtype is not None:
        x2 = x2.astype(compute_dtype)
        w = w.astype(compute_dtype)

    # Lane-dense output columns (unmasked vst): pad T up to a multiple of 128.
    T_pad = _round_up(T, _LANE)
    w_p = w if T_pad == T else jnp.pad(w, ((0, 0), (0, T_pad - T)))
    b_p = b if T_pad == T else jnp.pad(b, (0, T_pad - T))
    b_p = b_p.astype(jnp.float32).reshape(1, T_pad)

    in_itm = jnp.dtype(x2.dtype).itemsize
    w_itm = jnp.dtype(w_p.dtype).itemsize
    out_itm = jnp.dtype(out_dtype).itemsize

    budget, vmem_limit = _vmem_budget()
    TM, TN = _pick_tiles(M, nf, T_pad, in_itm, w_itm, out_itm, budget,
                         min_row_tiles=2)
    n_m = _cdiv(M, TM)                          # ragged last block is masked

    cost = pl.CostEstimate(
        flops=2 * M * nf * T_pad,
        transcendentals=0,
        bytes_accessed=(M * nf * in_itm + nf * T_pad * w_itm
                        + T_pad * 4 + M * T_pad * out_itm),
    )

    if TN == T_pad:
        # 1-D grid over M: W/bias block indices are constant -> DMA'd once,
        # resident in VMEM while the row tiles stream through.
        grid = (n_m,)
        in_specs = [
            pl.BlockSpec((TM, nf), lambda i: (i, 0)),
            pl.BlockSpec((nf, T_pad), lambda i: (0, 0)),
            pl.BlockSpec((1, T_pad), lambda i: (0, 0)),
        ]
        out_spec = pl.BlockSpec((TM, T_pad), lambda i: (i, 0))
    else:
        # Full weight does not fit VMEM: T tiles outer, M inner so each weight
        # slab is still fetched exactly once.
        grid = (T_pad // TN, n_m)
        in_specs = [
            pl.BlockSpec((TM, nf), lambda n, i: (i, 0)),
            pl.BlockSpec((nf, TN), lambda n, i: (0, n)),
            pl.BlockSpec((1, TN), lambda n, i: (0, n)),
        ]
        out_spec = pl.BlockSpec((TM, TN), lambda n, i: (i, n))

    out = pl.pallas_call(
        _head_matmul_kernel,
        out_shape=jax.ShapeDtypeStruct((M, T_pad), out_dtype),
        grid_spec=pltpu.PrefetchScalarGridSpec(
            num_scalar_prefetch=0,
            grid=grid,
            in_specs=in_specs,
            out_specs=out_spec,
        ),
        compiler_params=pltpu.CompilerParams(
            dimension_semantics=("parallel",) * len(grid),
            vmem_limit_bytes=int(vmem_limit),
        ),
        cost_estimate=cost,
    )(x2, w_p, b_p)

    return out[:, :T].reshape(B, V, T)


# ----------------------------------------------------------------------------
# individual = True : a separate Linear(nf, T) per variable
# ----------------------------------------------------------------------------
def flatten_head_individual(x, w, b, *, compute_dtype=jnp.bfloat16):
    """x: [B, V, d_model, patch_num], w: [V, nf, T] (pre-transposed), b: [V, T].

    Returns [B, V, T].  The variable axis is addressed purely via block indices
    on a [B, V*nf] input view / [B, V*T_pad] output view (no HBM transposes).
    """
    B, V, D, P = x.shape
    nf = D * P
    T = w.shape[-1]
    out_dtype = x.dtype

    x3 = x.reshape(B, V, nf)                    # contiguous merge: free
    wp = w
    if compute_dtype is not None:
        x3 = x3.astype(compute_dtype)
        wp = wp.astype(compute_dtype)

    # Per-variable x slab addressed by a column-block index on [B, V*nf];
    # this view is free when nf is lane-aligned.  Pad nf only when needed.
    if nf % _LANE == 0:
        nf_c = nf
    else:
        nf_c = _round_up(nf, _LANE)             # rare: one extra HBM pass
        x3 = jnp.pad(x3, ((0, 0), (0, 0), (0, nf_c - nf)))
        wp = jnp.pad(wp, ((0, 0), (0, nf_c - nf), (0, 0)))
    x2 = x3.reshape(B, V * nf_c)

    T_pad = _round_up(T, _LANE)
    if T_pad != T:
        wp = jnp.pad(wp, ((0, 0), (0, 0), (0, T_pad - T)))
        bp = jnp.pad(b, ((0, 0), (0, T_pad - T)))
    else:
        bp = b
    bp = bp.astype(jnp.float32).reshape(V, 1, T_pad)

    in_itm = jnp.dtype(x2.dtype).itemsize
    w_itm = jnp.dtype(wp.dtype).itemsize
    out_itm = jnp.dtype(out_dtype).itemsize

    budget, vmem_limit = _vmem_budget()
    TB, TN = _pick_tiles(B, nf_c, T_pad, in_itm, w_itm, out_itm, budget)
    n_b = _cdiv(B, TB)                          # ragged last B block is masked
    n_t = T_pad // TN                           # TN divides T_pad by construction

    cost = pl.CostEstimate(
        flops=2 * B * V * nf_c * T_pad,
        transcendentals=0,
        bytes_accessed=(B * V * nf_c * in_itm + V * nf_c * T_pad * w_itm
                        + V * T_pad * 4 + B * V * T_pad * out_itm),
    )

    # Grid: (variable, T-tile, B-tile) with B innermost, so each per-variable
    # weight slab is DMA'd once and stays resident while the batch streams.
    grid = (V, n_t, n_b)
    out = pl.pallas_call(
        _head_matmul_kernel,
        out_shape=jax.ShapeDtypeStruct((B, V * T_pad), out_dtype),
        grid_spec=pltpu.PrefetchScalarGridSpec(
            num_scalar_prefetch=0,
            grid=grid,
            in_specs=[
                pl.BlockSpec((TB, nf_c), lambda v, n, bb: (bb, v)),
                pl.BlockSpec((None, nf_c, TN), lambda v, n, bb: (v, 0, n)),
                pl.BlockSpec((None, 1, TN), lambda v, n, bb: (v, 0, n)),
            ],
            out_specs=pl.BlockSpec((TB, TN),
                                   lambda v, n, bb: (bb, v * n_t + n)),
        ),
        compiler_params=pltpu.CompilerParams(
            dimension_semantics=("parallel",) * len(grid),
            vmem_limit_bytes=int(vmem_limit),
        ),
        cost_estimate=cost,
    )(x2, wp, bp)

    return out.reshape(B, V, T_pad)[:, :, :T]


# ----------------------------------------------------------------------------
# Demo / self-check
# ----------------------------------------------------------------------------
if __name__ == "__main__":
    # Small shapes consistent with the module: x = [bs, n_vars, d_model, patch_num]
    B, V, D, P = 2, 3, 16, 8
    nf = D * P          # 128
    T = 24              # target_window

    key = jax.random.PRNGKey(0)
    kx, kw, kb, kwi, kbi = jax.random.split(key, 5)

    x = jax.random.normal(kx, (B, V, D, P), dtype=jnp.float32)

    # PyTorch Linear weight is [T, nf]; we store the transpose [nf, T] so the
    # kernel computes x @ W^T + b directly.
    w_shared = jax.random.normal(kw, (nf, T), dtype=jnp.float32) * 0.02
    b_shared = jax.random.normal(kb, (T,), dtype=jnp.float32) * 0.02
    w_ind = jax.random.normal(kwi, (V, nf, T), dtype=jnp.float32) * 0.02
    b_ind = jax.random.normal(kbi, (V, T), dtype=jnp.float32) * 0.02

    ref_shared = jnp.einsum("bvf,ft->bvt", x.reshape(B, V, nf), w_shared) + b_shared
    ref_ind = jnp.einsum("bvf,vft->bvt", x.reshape(B, V, nf), w_ind) + b_ind[None]

    # Exactness check (f32 compute path).
    y_s32 = jax.block_until_ready(
        flatten_head_shared(x, w_shared, b_shared, compute_dtype=jnp.float32))
    y_i32 = jax.block_until_ready(
        flatten_head_individual(x, w_ind, b_ind, compute_dtype=jnp.float32))
    assert y_s32.shape == (B, V, T) and y_i32.shape == (B, V, T)
    assert jnp.allclose(y_s32, ref_shared, atol=1e-5, rtol=1e-5)
    assert jnp.allclose(y_i32, ref_ind, atol=1e-5, rtol=1e-5)

    # Default path (bf16 inputs, f32 accumulation): looser tolerance expected.
    y_s = jax.block_until_ready(flatten_head_shared(x, w_shared, b_shared))
    y_i = jax.block_until_ready(flatten_head_individual(x, w_ind, b_ind))
    assert y_s.shape == (B, V, T) and y_i.shape == (B, V, T)
    assert jnp.allclose(y_s, ref_shared, atol=2e-2, rtol=2e-2)
    assert jnp.allclose(y_i, ref_ind, atol=2e-2, rtol=2e-2)

    print("KERNEL_OK")
</pallas_src>

<mosaic_0001>
module attributes {stable_mosaic.version = 11 : i64} {
  func.func @_head_matmul_kernel(%arg0: i32, %arg1: memref<8x128xf32, #tpu.memory_space<vmem>>, %arg2: memref<128x128xf32, #tpu.memory_space<vmem>>, %arg3: memref<1x128xf32, #tpu.memory_space<vmem>>, %arg4: memref<8x128xf32, #tpu.memory_space<vmem>>) attributes {dimension_semantics = [#tpu.dimension_semantics<parallel>], iteration_bounds = array<i64: 1>, scalar_prefetch = 0 : i64, scratch_operands = 0 : i64, tpu.core_type = #tpu.core_type<tc>, window_params = [{transform_indices = @transform_0, window_bounds = array<i64: 8, 128>}, {pipeline_mode = #tpu.pipeline_mode<synchronous>, transform_indices = @transform_1, window_bounds = array<i64: 128, 128>}, {pipeline_mode = #tpu.pipeline_mode<synchronous>, transform_indices = @transform_2, window_bounds = array<i64: 1, 128>}, {transform_indices = @transform_3, window_bounds = array<i64: 8, 128>}]} {
    %c0 = arith.constant 0 : index
    %c0_0 = arith.constant 0 : index
    %0 = vector.load %arg1[%c0, %c0_0] : memref<8x128xf32, #tpu.memory_space<vmem>>, vector<8x128xf32>
    %c0_1 = arith.constant 0 : index
    %c0_2 = arith.constant 0 : index
    %1 = vector.load %arg2[%c0_1, %c0_2] : memref<128x128xf32, #tpu.memory_space<vmem>>, vector<128x128xf32>
    %cst = arith.constant dense<0.000000e+00> : vector<8x128xf32>
    %2 = tpu.matmul %0, %1, %cst {dimension_numbers = #tpu.dot_dimension_numbers<[1], [0], [0], [1], [0, 0, 1, 1], [], []>} : vector<8x128xf32>, vector<128x128xf32>, vector<8x128xf32> -> vector<8x128xf32>
    %c0_3 = arith.constant 0 : index
    %c0_4 = arith.constant 0 : index
    %3 = vector.load %arg3[%c0_3, %c0_4] : memref<1x128xf32, #tpu.memory_space<vmem>>, vector<1x128xf32>
    %4 = vector.broadcast %3 : vector<1x128xf32> to vector<8x128xf32>
    %5 = arith.addf %2, %4 : vector<8x128xf32>
    %c0_5 = arith.constant 0 : index
    %c0_6 = arith.constant 0 : index
    %6 = vector.load %arg4[%c0_5, %c0_6] : memref<8x128xf32, #tpu.memory_space<vmem>>, vector<8x128xf32>
    tpu.vector_store %arg4[%c0_5, %c0_6], %5 {strides = array<i32>} : memref<8x128xf32, #tpu.memory_space<vmem>>, vector<8x128xf32>,
    return
  }
  func.func @transform_0(%arg0: i32) -> (i32, i32) {
    %c0_i32 = arith.constant 0 : i32
    %c0_i32_0 = arith.constant 0 : i32
    return %arg0, %c0_i32 : i32, i32
  }
  func.func @transform_1(%arg0: i32) -> (i32, i32) {
    %c0_i32 = arith.constant 0 : i32
    %c0_i32_0 = arith.constant 0 : i32
    %c0_i32_1 = arith.constant 0 : i32
    return %c0_i32, %c0_i32_0 : i32, i32
  }
  func.func @transform_2(%arg0: i32) -> (i32, i32) {
    %c0_i32 = arith.constant 0 : i32
    %c0_i32_0 = arith.constant 0 : i32
    %c0_i32_1 = arith.constant 0 : i32
    return %c0_i32, %c0_i32_0 : i32, i32
  }
  func.func @transform_3(%arg0: i32) -> (i32, i32) {
    %c0_i32 = arith.constant 0 : i32
    %c0_i32_0 = arith.constant 0 : i32
    return %arg0, %c0_i32 : i32, i32
  }
}

</mosaic_0001>

<llo_original>
// kernel: tpu_custom_call.1
$region0: #{tpu_custom_call.1}
  #allocation0 [shape = 'u32[]', space=smem, size = 0x4, offset = 0x4, fixed_abs, tag = 'smem constant byte address 0x4 - core index']
  #allocation1 [shape = 'u32[144,128]{1,0:T(1,128)}', space=vmem, size = 0x12000, scoped, tag = 'internal scratch']
  %s0 = inlined_call_operand.hbm [shape: f32[6,128], index: 0, kind: input, shape index: {}]
  %s1 = inlined_call_operand.hbm [shape: f32[128,128], index: 1, kind: input, shape index: {}]
  %s2 = inlined_call_operand.vmem [shape: f32[1,128], index: 2, kind: input, shape index: {}]
  %s3 = inlined_call_operand.hbm [shape: f32[6,128], index: 3, kind: output, shape index: {}]
  %s4 = sld [smem:[#allocation0]]
  $region30: #{tpu_custom_call.1} parent=0
    _
  %s6 = ssub.s32 1, %s4
  %s7 = scalar_select 0, %s6, %s4
  $region1: #{tpu_custom_call.1} parent=0
    #allocation2 [shape = 'u8[4096]{0}', space=vmem, size = 0x1000, scoped, tag = 'input window, operand 0, single buffered']
    #allocation3 [shape = 's32[1]{0}', space=sflag, size = 0x4, scoped, tag = 'scoped memory for tpu_custom_call.1']
    #allocation4 [shape = 's32[1]{0}', space=sflag, size = 0x4, scoped, tag = 'scoped memory for tpu_custom_call.1']
    #allocation5 [shape = 'u8[65536]{0}', space=vmem, size = 0x10000, scoped, tag = 'input window, operand 1, single buffered']
    #allocation6 [shape = 's32[1]{0}', space=sflag, size = 0x4, scoped, tag = 'scoped memory for tpu_custom_call.1']
    #allocation7 [shape = 'u8[4096]{0}', space=vmem, size = 0x1000, scoped, tag = 'output window, operand 0, single buffered']
    %8 = vsyncpa [#allocation3], 0
    %9 = vsyncpa [#allocation6], 0
    %10 = vsyncpa [#allocation4], 0
    // Predicated region
    $region2: #{tpu_custom_call.1} parent=1 // pred_check
      _
    $region3: #{tpu_custom_call.1} parent=1 // pred_check_branch
      %12 = sbr.rel (0) target = $region5
    $region4: #{tpu_custom_call.1} parent=1 // pred_region
      %s14 = ssub.s32 128, 128
      %15 = vsyncadd [#allocation3], %s14
      %s17 = sshll.u32 [#allocation2], 4
      %s18 = int_to_ptr.vmem [resolvable:$true] %s17
      %20 = dma.hbm_to_vmem [thread:$0]  %s0, 128, %s18, [#allocation3]
    $region5: #{tpu_custom_call.1} parent=1 // pred_fallthru
      _
    // Predicated region
    $region6: #{tpu_custom_call.1} parent=1 // pred_check
      _
    $region7: #{tpu_custom_call.1} parent=1 // pred_check_branch
      %22 = sbr.rel (0) target = $region9
    $region8: #{tpu_custom_call.1} parent=1 // pred_region
      %s24 = ssub.s32 2048, 2048
      %25 = vsyncadd [#allocation6], %s24
      %s26 = sshll.u32 [#allocation5], 4
      %s27 = int_to_ptr.vmem [resolvable:$true] %s26
      %32 = dma.hbm_to_vmem [thread:$0]  %s1, 2048, %s27, [#allocation6], 128, 128, 8
    $region9: #{tpu_custom_call.1} parent=1 // pred_fallthru
      _
    // Predicated region
    $region10: #{tpu_custom_call.1} parent=1 // pred_check
      _
    $region11: #{tpu_custom_call.1} parent=1 // pred_check_branch
      %34 = sbr.rel (0) target = $region13
    $region12: #{tpu_custom_call.1} parent=1 // pred_region
      _
    $region13: #{tpu_custom_call.1} parent=1 // pred_fallthru
      _
    // Predicated region
    $region14: #{tpu_custom_call.1} parent=1 // pred_check
      _
    $region15: #{tpu_custom_call.1} parent=1 // pred_check_branch
      %36 = sbr.rel (0) target = $region17
    $region16: #{tpu_custom_call.1} parent=1 // pred_region
      %37 = dma.done [#allocation3], 128
    $region17: #{tpu_custom_call.1} parent=1 // pred_fallthru
      _
    // Predicated region
    $region18: #{tpu_custom_call.1} parent=1 // pred_check
      _
    $region19: #{tpu_custom_call.1} parent=1 // pred_check_branch
      %39 = sbr.rel (0) target = $region21
    $region20: #{tpu_custom_call.1} parent=1 // pred_region
      %40 = dma.done [#allocation6], 2048
    $region21: #{tpu_custom_call.1} parent=1 // pred_fallthru
      _
    %v41 = vld [vmem:[#allocation2] sm:$0xff]
    %v42 = vld [vmem:[#allocation5] sm:$0xff]
    %v43 = vld [vmem:[#allocation5 + $0x8] sm:$0xff]
    %v44 = vld [vmem:[#allocation5 + $0x10] sm:$0xff]
    %v45 = vld [vmem:[#allocation5 + $0x18] sm:$0xff]
    %v46 = vld [vmem:[#allocation5 + $0x20] sm:$0xff]
    %v47 = vld [vmem:[#allocation5 + $0x28] sm:$0xff]
    %v48 = vld [vmem:[#allocation5 + $0x30] sm:$0xff]
    %v49 = vld [vmem:[#allocation5 + $0x38] sm:$0xff]
    %v50 = vld [vmem:[#allocation5 + $0x40] sm:$0xff]
    %v51 = vld [vmem:[#allocation5 + $0x48] sm:$0xff]
    %v52 = vld [vmem:[#allocation5 + $0x50] sm:$0xff]
    %v53 = vld [vmem:[#allocation5 + $0x58] sm:$0xff]
    %v54 = vld [vmem:[#allocation5 + $0x60] sm:$0xff]
    %v55 = vld [vmem:[#allocation5 + $0x68] sm:$0xff]
    %v56 = vld [vmem:[#allocation5 + $0x70] sm:$0xff]
    %v57 = vld [vmem:[#allocation5 + $0x78] sm:$0xff]
    %v58 = vld [vmem:[%s2] sm:$0x1]
    %v60 = vlaneseq
    %v61 = vshrl.u32 %v60, 7
    %v62 = vsub.s32 0, %v61
    %v63 = vrot.slane %v58, %v62
    %65 = vmatprep.subr.mxu0 0.0
    %66 = vmatpush1.msra.mxu0 %v42
    %67 = vmatprep.subr.mxu0 0.0
    %68 = vmatpush1.msra.mxu0 %v43
    %69 = vmatprep.subr.mxu0 0.0
    %70 = vmatpush1.msra.mxu0 %v44
    %71 = vmatprep.subr.mxu0 0.0
    %72 = vmatpush1.msra.mxu0 %v45
    %73 = vmatprep.subr.mxu0 0.0
    %74 = vmatpush1.msra.mxu0 %v46
    %75 = vmatprep.subr.mxu0 0.0
    %76 = vmatpush1.msra.mxu0 %v47
    %77 = vmatprep.subr.mxu0 0.0
    %78 = vmatpush1.msra.mxu0 %v48
    %79 = vmatprep.subr.mxu0 0.0
    %80 = vmatpush1.msra.mxu0 %v49
    %81 = vmatprep.subr.mxu0 0.0
    %82 = vmatpush1.msra.mxu0 %v50
    %83 = vmatprep.subr.mxu0 0.0
    %84 = vmatpush1.msra.mxu0 %v51
    %85 = vmatprep.subr.mxu0 0.0
    %86 = vmatpush1.msra.mxu0 %v52
    %87 = vmatprep.subr.mxu0 0.0
    %88 = vmatpush1.msra.mxu0 %v53
    %89 = vmatprep.subr.mxu0 0.0
    %90 = vmatpush1.msra.mxu0 %v54
    %91 = vmatprep.subr.mxu0 0.0
    %92 = vmatpush1.msra.mxu0 %v55
    %93 = vmatprep.subr.mxu0 0.0
    %94 = vmatpush1.msra.mxu0 %v56
    %95 = vmatprep.subr.mxu0 0.0
    %96 = vmatpush1.msra.mxu0 %v57
    %97 = vmatprep.subr.mxu0 0.0
    %98 = vmatpush1.msra.mxu0 0.0
    %99 = vmatprep.subr.mxu0 0.0
    %100 = vmatpush1.msra.mxu0 0.0
    %101 = vmatprep.subr.mxu0 0.0
    %102 = vmatpush1.msra.mxu0 0.0
    %103 = vmatprep.subr.mxu0 0.0
    %104 = vmatpush1.msra.mxu0 0.0
    %105 = vmatprep.subr.mxu0 0.0
    %106 = vmatpush1.msra.mxu0 0.0
    %107 = vmatprep.subr.mxu0 0.0
    %108 = vmatpush1.msra.mxu0 0.0
    %109 = vmatprep.subr.mxu0 0.0
    %110 = vmatpush1.msra.mxu0 0.0
    %111 = vmatprep.subr.mxu0 0.0
    %112 = vmatpush1.msra.mxu0 0.0
    %113 = vmatprep.subr.mxu0 0.0
    %114 = vmatpush1.msra.mxu0 0.0
    %115 = vmatprep.subr.mxu0 0.0
    %116 = vmatpush1.msra.mxu0 0.0
    %117 = vmatprep.subr.mxu0 0.0
    %118 = vmatpush1.msra.mxu0 0.0
    %119 = vmatprep.subr.mxu0 0.0
    %120 = vmatpush1.msra.mxu0 0.0
    %121 = vmatprep.subr.mxu0 0.0
    %122 = vmatpush1.msra.mxu0 0.0
    %123 = vmatprep.subr.mxu0 0.0
    %124 = vmatpush1.msra.mxu0 0.0
    %125 = vmatprep.subr.mxu0 0.0
    %126 = vmatpush1.msra.mxu0 0.0
    %127 = vmatprep.subr.mxu0 0.0
    %128 = vmatpush1.msra.mxu0 0.0
    %129 = vmatprep.mubr.f32.mxu0 0.0
    %130 = vmatmul.mubr.f32.gmra.mrb[0].mxu0 %v41
    %v131 = vpop.f32.mrb[0].mxu0
    %v132 = vadd.f32 %v63, %v131
    %v133 = vpop.f32.mrb[0].mxu0
    %134 = vdwg.mxu0
    %135 = vst [vmem:[#allocation7] sm:$0xff] %v132
    // Predicated region
    $region22: #{tpu_custom_call.1} parent=1 // pred_check
      _
    $region23: #{tpu_custom_call.1} parent=1 // pred_check_branch
      %137 = sbr.rel (0) target = $region25
    $region24: #{tpu_custom_call.1} parent=1 // pred_region
      %s139 = ssub.s32 128, 128
      %140 = vsyncadd [#allocation4], %s139
      %s142 = sshll.u32 [#allocation7], 4
      %s143 = int_to_ptr.vmem [resolvable:$true] %s142
      %145 = dma.vmem_to_hbm [thread:$0]  %s143, 128, %s3, [#allocation4]
    $region25: #{tpu_custom_call.1} parent=1 // pred_fallthru
      _
    // Predicated region
    $region26: #{tpu_custom_call.1} parent=1 // pred_check
      _
    $region27: #{tpu_custom_call.1} parent=1 // pred_check_branch
      %147 = sbr.rel (0) target = $region29
    $region28: #{tpu_custom_call.1} parent=1 // pred_region
      %148 = dma.done [#allocation4], 128
    $region29: #{tpu_custom_call.1} parent=1 // pred_fallthru
      _
    %149 = vsyncpa [#allocation3], 1
    %150 = vsyncpa [#allocation6], 1
    %151 = vsyncpa [#allocation4], 1

</llo_original>
